<compile_context>
chip_gen: v7x
topology: tpu7x:2x2x1
jax: 0.10.0
libtpu: 0.0.40
codegen_flags: <defaults>
</compile_context>

<pallas_src>
import jax
import jax.numpy as jnp
from jax.experimental import pallas as pl
from jax.experimental.pallas import tpu as pltpu

MAGNITUDE_WEIGHT = 1.0
DIRECTION_WEIGHT = 1.0
EPS = 1e-6

DEFAULT_TILE_B = 32768  # lanes per grid step (multiple of 128)


def _round_up(x: int, m: int) -> int:
    return ((x + m - 1) // m) * m


def _make_piv_kernel(inv_mse_den: float, inv_b: float):
    """Kernel factory; bakes the true (un-padded) normalizers in as constants."""

    def kernel(pred_ref, target_ref, out_ref, acc_sq_ref, acc_cos_ref):
        step = pl.program_id(0)

        @pl.when(step == 0)
        def _():
            acc_sq_ref[...] = jnp.zeros_like(acc_sq_ref)
            acc_cos_ref[...] = jnp.zeros_like(acc_cos_ref)

        p = pred_ref[...]    # (2, TILE_B) f32, B on the lane axis
        t = target_ref[...]

        pu, pv = p[0:1, :], p[1:2, :]   # (1, TILE_B) each
        tu, tv = t[0:1, :], t[1:2, :]

        # ---- squared error (elementwise, VPU) ----
        du = pu - tu
        dv = pv - tv
        sq = du * du + dv * dv

        # ---- cosine similarity along the channel axis (elementwise + EUP) ----
        dot = pu * tu + pv * tv
        norm_p = jnp.sqrt(pu * pu + pv * pv)   # EUP
        norm_t = jnp.sqrt(tu * tu + tv * tv)   # EUP
        cos = dot / (norm_p * norm_t + EPS)

        # One cross-lane reduce each per tile; accumulate into (1,1) scratch.
        acc_sq_ref[...] += jnp.sum(sq, keepdims=True)
        acc_cos_ref[...] += jnp.sum(cos, keepdims=True)

        @pl.when(step == pl.num_programs(0) - 1)
        def _():
            mse = acc_sq_ref[...] * inv_mse_den
            dir_loss = 1.0 - acc_cos_ref[...] * inv_b
            out_ref[...] = MAGNITUDE_WEIGHT * mse + DIRECTION_WEIGHT * dir_loss

    return kernel


def piv_loss(pred, target, *, tile_b: int = DEFAULT_TILE_B):
    """pred, target: [B, 2, 1, 1] (NCHW). Returns scalar fp32 loss."""
    assert pred.shape == target.shape
    B, C, H, W = pred.shape
    assert C == 2 and H == 1 and W == 1

    # Lane-dense layout: (2, B) so the batch dim maps to the 128-lane axis.
    p = pred.reshape(B, C).astype(jnp.float32).T
    t = target.reshape(B, C).astype(jnp.float32).T

    # Don't over-pad tiny batches; keep tile a multiple of 128.
    tile_b = min(tile_b, _round_up(B, 128))
    padded_b = _round_up(B, tile_b)
    if padded_b != B:
        pad = padded_b - B
        # Zero padding contributes exactly 0 to both partial sums
        # (diff = 0; cos = 0 / (0 + eps) = 0), so no tail mask is needed.
        p = jnp.pad(p, ((0, 0), (0, pad)))
        t = jnp.pad(t, ((0, 0), (0, pad)))
    num_tiles = padded_b // tile_b

    kernel = _make_piv_kernel(inv_mse_den=1.0 / float(B * C), inv_b=1.0 / float(B))

    out = pl.pallas_call(
        kernel,
        out_shape=jax.ShapeDtypeStruct((1, 1), jnp.float32),
        grid_spec=pltpu.PrefetchScalarGridSpec(
            num_scalar_prefetch=0,
            grid=(num_tiles,),
            in_specs=[
                pl.BlockSpec((C, tile_b), lambda i: (0, i)),
                pl.BlockSpec((C, tile_b), lambda i: (0, i)),
            ],
            out_specs=pl.BlockSpec((1, 1), lambda i: (0, 0)),
            scratch_shapes=[
                pltpu.VMEM((1, 1), jnp.float32),  # running sum of squared diff
                pltpu.VMEM((1, 1), jnp.float32),  # running sum of cos_sim
            ],
        ),
        compiler_params=pltpu.CompilerParams(
            dimension_semantics=("arbitrary",),      # reduction axis (accumulator)
            vmem_limit_bytes=16 * 1024 * 1024,       # safe on v5e/v6e/v7x
        ),
    )(p, t)
    return out[0, 0]


def piv_loss_ref(pred, target):
    """Pure-JAX reference mirroring the PyTorch module."""
    p = pred.astype(jnp.float32)
    t = target.astype(jnp.float32)
    mse = jnp.mean((p - t) ** 2)
    dot = jnp.sum(p * t, axis=1)
    norm_p = jnp.sqrt(jnp.sum(p * p, axis=1))
    norm_t = jnp.sqrt(jnp.sum(t * t, axis=1))
    cos = dot / (norm_p * norm_t + EPS)
    dir_loss = 1.0 - jnp.mean(cos)
    return MAGNITUDE_WEIGHT * mse + DIRECTION_WEIGHT * dir_loss


if __name__ == "__main__":
    key = jax.random.PRNGKey(0)

    # Small case (as in the module spec): B=8, single-tile path.
    k1, k2, k3, k4 = jax.random.split(key, 4)
    B = 8
    pred = jax.random.normal(k1, (B, 2, 1, 1), dtype=jnp.float32)
    target = jax.random.normal(k2, (B, 2, 1, 1), dtype=jnp.float32)

    loss = piv_loss(pred, target)
    jax.block_until_ready(loss)
    ref = piv_loss_ref(pred, target)
    assert jnp.allclose(loss, ref, atol=1e-5, rtol=1e-5), (loss, ref)

    # Larger, non-multiple batch to exercise the grid + zero-padded tail.
    B2 = 1000
    pred2 = jax.random.normal(k3, (B2, 2, 1, 1), dtype=jnp.float32)
    target2 = jax.random.normal(k4, (B2, 2, 1, 1), dtype=jnp.float32)
    loss2 = piv_loss(pred2, target2, tile_b=256)  # 4 grid steps, 24-lane pad
    jax.block_until_ready(loss2)
    ref2 = piv_loss_ref(pred2, target2)
    assert jnp.allclose(loss2, ref2, atol=1e-5, rtol=1e-4), (loss2, ref2)

    print("KERNEL_OK")
</pallas_src>

<mosaic_0001>
module attributes {stable_mosaic.version = 11 : i64} {
  func.func @kernel(%arg0: i32, %arg1: memref<2x128xf32, #tpu.memory_space<vmem>>, %arg2: memref<2x128xf32, #tpu.memory_space<vmem>>, %arg3: memref<1x1xf32, #tpu.memory_space<vmem>>, %arg4: memref<1x1xf32, #tpu.memory_space<vmem>>, %arg5: memref<1x1xf32, #tpu.memory_space<vmem>>) attributes {dimension_semantics = [#tpu.dimension_semantics<arbitrary>], iteration_bounds = array<i64: 1>, scalar_prefetch = 0 : i64, scratch_operands = 2 : i64, tpu.core_type = #tpu.core_type<tc>, window_params = [{transform_indices = @transform_0, window_bounds = array<i64: 2, 128>}, {transform_indices = @transform_1, window_bounds = array<i64: 2, 128>}, {pipeline_mode = #tpu.pipeline_mode<synchronous>, transform_indices = @transform_2, window_bounds = array<i64: 1, 1>}]} {
    %c0_i32 = arith.constant 0 : i32
    %0 = arith.cmpi eq, %arg0, %c0_i32 : i32
    %1 = arith.extui %0 : i1 to i32
    %c0_i32_0 = arith.constant 0 : i32
    %2 = arith.cmpi ne, %1, %c0_i32_0 : i32
    scf.if %2 {
      %cst_16 = arith.constant 0.000000e+00 : f32
      %48 = vector.broadcast %cst_16 : f32 to vector<1x1xf32>
      %c0_17 = arith.constant 0 : index
      %c0_18 = arith.constant 0 : index
      %49 = vector.load %arg4[%c0_17, %c0_18] : memref<1x1xf32, #tpu.memory_space<vmem>>, vector<1x1xf32>
      tpu.vector_store %arg4[%c0_17, %c0_18], %48 {strides = array<i32>} : memref<1x1xf32, #tpu.memory_space<vmem>>, vector<1x1xf32>,
      %cst_19 = arith.constant 0.000000e+00 : f32
      %50 = vector.broadcast %cst_19 : f32 to vector<1x1xf32>
      %c0_20 = arith.constant 0 : index
      %c0_21 = arith.constant 0 : index
      %51 = vector.load %arg5[%c0_20, %c0_21] : memref<1x1xf32, #tpu.memory_space<vmem>>, vector<1x1xf32>
      tpu.vector_store %arg5[%c0_20, %c0_21], %50 {strides = array<i32>} : memref<1x1xf32, #tpu.memory_space<vmem>>, vector<1x1xf32>,
    } else {
    }
    %c0 = arith.constant 0 : index
    %c0_1 = arith.constant 0 : index
    %3 = vector.load %arg1[%c0, %c0_1] : memref<2x128xf32, #tpu.memory_space<vmem>>, vector<2x128xf32>
    %c0_2 = arith.constant 0 : index
    %c0_3 = arith.constant 0 : index
    %4 = vector.load %arg2[%c0_2, %c0_3] : memref<2x128xf32, #tpu.memory_space<vmem>>, vector<2x128xf32>
    %5 = vector.extract_strided_slice %3 {offsets = [0, 0], sizes = [1, 128], strides = [1, 1]} : vector<2x128xf32> to vector<1x128xf32>
    %6 = vector.extract_strided_slice %3 {offsets = [1, 0], sizes = [1, 128], strides = [1, 1]} : vector<2x128xf32> to vector<1x128xf32>
    %7 = vector.extract_strided_slice %4 {offsets = [0, 0], sizes = [1, 128], strides = [1, 1]} : vector<2x128xf32> to vector<1x128xf32>
    %8 = vector.extract_strided_slice %4 {offsets = [1, 0], sizes = [1, 128], strides = [1, 1]} : vector<2x128xf32> to vector<1x128xf32>
    %9 = arith.subf %5, %7 : vector<1x128xf32>
    %10 = arith.subf %6, %8 : vector<1x128xf32>
    %11 = arith.mulf %9, %9 : vector<1x128xf32>
    %12 = arith.mulf %10, %10 : vector<1x128xf32>
    %13 = arith.addf %11, %12 : vector<1x128xf32>
    %14 = arith.mulf %5, %7 : vector<1x128xf32>
    %15 = arith.mulf %6, %8 : vector<1x128xf32>
    %16 = arith.addf %14, %15 : vector<1x128xf32>
    %17 = arith.mulf %5, %5 : vector<1x128xf32>
    %18 = arith.mulf %6, %6 : vector<1x128xf32>
    %19 = arith.addf %17, %18 : vector<1x128xf32>
    %20 = math.sqrt %19 : vector<1x128xf32>
    %21 = arith.mulf %7, %7 : vector<1x128xf32>
    %22 = arith.mulf %8, %8 : vector<1x128xf32>
    %23 = arith.addf %21, %22 : vector<1x128xf32>
    %24 = math.sqrt %23 : vector<1x128xf32>
    %25 = arith.mulf %20, %24 : vector<1x128xf32>
    %cst = arith.constant 9.99999997E-7 : f32
    %26 = vector.broadcast %cst : f32 to vector<1x128xf32>
    %27 = arith.addf %25, %26 : vector<1x128xf32>
    %28 = arith.divf %16, %27 : vector<1x128xf32>
    %c0_4 = arith.constant 0 : index
    %c0_5 = arith.constant 0 : index
    %29 = vector.load %arg4[%c0_4, %c0_5] : memref<1x1xf32, #tpu.memory_space<vmem>>, vector<1x1xf32>
    %30 = vector.shape_cast %13 : vector<1x128xf32> to vector<1x1x128xf32>
    %cst_6 = arith.constant dense<0.000000e+00> : vector<1xf32>
    %31 = vector.multi_reduction <add>, %30, %cst_6 [1, 2] : vector<1x1x128xf32> to vector<1xf32>
    %32 = vector.shape_cast %31 : vector<1xf32> to vector<1x1x1xf32>
    %33 = vector.extract %32[0, 0, 0] : f32 from vector<1x1x1xf32>
    %34 = vector.broadcast %33 : f32 to vector<1x1xf32>
    %35 = arith.addf %29, %34 : vector<1x1xf32>
    %c0_7 = arith.constant 0 : index
    %c0_8 = arith.constant 0 : index
    %36 = vector.load %arg4[%c0_7, %c0_8] : memref<1x1xf32, #tpu.memory_space<vmem>>, vector<1x1xf32>
    tpu.vector_store %arg4[%c0_7, %c0_8], %35 {strides = array<i32>} : memref<1x1xf32, #tpu.memory_space<vmem>>, vector<1x1xf32>,
    %c0_9 = arith.constant 0 : index
    %c0_10 = arith.constant 0 : index
    %37 = vector.load %arg5[%c0_9, %c0_10] : memref<1x1xf32, #tpu.memory_space<vmem>>, vector<1x1xf32>
    %38 = vector.shape_cast %28 : vector<1x128xf32> to vector<1x1x128xf32>
    %cst_11 = arith.constant dense<0.000000e+00> : vector<1xf32>
    %39 = vector.multi_reduction <add>, %38, %cst_11 [1, 2] : vector<1x1x128xf32> to vector<1xf32>
    %40 = vector.shape_cast %39 : vector<1xf32> to vector<1x1x1xf32>
    %41 = vector.extract %40[0, 0, 0] : f32 from vector<1x1x1xf32>
    %42 = vector.broadcast %41 : f32 to vector<1x1xf32>
    %43 = arith.addf %37, %42 : vector<1x1xf32>
    %c0_12 = arith.constant 0 : index
    %c0_13 = arith.constant 0 : index
    %44 = vector.load %arg5[%c0_12, %c0_13] : memref<1x1xf32, #tpu.memory_space<vmem>>, vector<1x1xf32>
    tpu.vector_store %arg5[%c0_12, %c0_13], %43 {strides = array<i32>} : memref<1x1xf32, #tpu.memory_space<vmem>>, vector<1x1xf32>,
    %c0_i32_14 = arith.constant 0 : i32
    %45 = arith.cmpi eq, %arg0, %c0_i32_14 : i32
    %46 = arith.extui %45 : i1 to i32
    %c0_i32_15 = arith.constant 0 : i32
    %47 = arith.cmpi ne, %46, %c0_i32_15 : i32
    scf.if %47 {
      %c0_16 = arith.constant 0 : index
      %c0_17 = arith.constant 0 : index
      %48 = vector.load %arg4[%c0_16, %c0_17] : memref<1x1xf32, #tpu.memory_space<vmem>>, vector<1x1xf32>
      %cst_18 = arith.constant 6.250000e-02 : f32
      %49 = vector.broadcast %cst_18 : f32 to vector<1x1xf32>
      %50 = arith.mulf %48, %49 : vector<1x1xf32>
      %c0_19 = arith.constant 0 : index
      %c0_20 = arith.constant 0 : index
      %51 = vector.load %arg5[%c0_19, %c0_20] : memref<1x1xf32, #tpu.memory_space<vmem>>, vector<1x1xf32>
      %cst_21 = arith.constant 1.250000e-01 : f32
      %52 = vector.broadcast %cst_21 : f32 to vector<1x1xf32>
      %53 = arith.mulf %51, %52 : vector<1x1xf32>
      %cst_22 = arith.constant 1.000000e+00 : f32
      %54 = vector.broadcast %cst_22 : f32 to vector<1x1xf32>
      %55 = arith.subf %54, %53 : vector<1x1xf32>
      %cst_23 = arith.constant 1.000000e+00 : f32
      %56 = vector.broadcast %cst_23 : f32 to vector<1x1xf32>
      %57 = arith.mulf %56, %50 : vector<1x1xf32>
      %cst_24 = arith.constant 1.000000e+00 : f32
      %58 = vector.broadcast %cst_24 : f32 to vector<1x1xf32>
      %59 = arith.mulf %58, %55 : vector<1x1xf32>
      %60 = arith.addf %57, %59 : vector<1x1xf32>
      %c0_25 = arith.constant 0 : index
      %c0_26 = arith.constant 0 : index
      %61 = vector.load %arg3[%c0_25, %c0_26] : memref<1x1xf32, #tpu.memory_space<vmem>>, vector<1x1xf32>
      tpu.vector_store %arg3[%c0_25, %c0_26], %60 {strides = array<i32>} : memref<1x1xf32, #tpu.memory_space<vmem>>, vector<1x1xf32>,
    } else {
    }
    return
  }
  func.func @transform_0(%arg0: i32) -> (i32, i32) {
    %c0_i32 = arith.constant 0 : i32
    %c0_i32_0 = arith.constant 0 : i32
    return %c0_i32, %arg0 : i32, i32
  }
  func.func @transform_1(%arg0: i32) -> (i32, i32) {
    %c0_i32 = arith.constant 0 : i32
    %c0_i32_0 = arith.constant 0 : i32
    return %c0_i32, %arg0 : i32, i32
  }
  func.func @transform_2(%arg0: i32) -> (i32, i32) {
    %c0_i32 = arith.constant 0 : i32
    %c0_i32_0 = arith.constant 0 : i32
    %c0_i32_1 = arith.constant 0 : i32
    return %c0_i32, %c0_i32_0 : i32, i32
  }
}

</mosaic_0001>

<llo_original>
// kernel: tpu_custom_call.1
$region0: #{tpu_custom_call.1}
  #allocation0 [shape = 'u32[]', space=smem, size = 0x4, offset = 0x4, fixed_abs, tag = 'smem constant byte address 0x4 - core index']
  #allocation1 [shape = 'u32[144,128]{1,0:T(1,128)}', space=vmem, size = 0x12000, scoped, tag = 'internal scratch']
  #allocation2 [shape = 'f32[1,1]{1,0:T(1,128)}', space=vmem, size = 0x200, scoped, tag = 'scratch operand']
  #allocation3 [shape = 'f32[1,1]{1,0:T(1,128)}', space=vmem, size = 0x200, scoped, tag = 'scratch operand']
  %s0 = inlined_call_operand.hbm [shape: f32[2,128], index: 0, kind: input, shape index: {}]
  %s1 = inlined_call_operand.vmem [shape: f32[2,128], index: 1, kind: input, shape index: {}]
  %s2 = inlined_call_operand.hbm [shape: f32[1,1], index: 2, kind: output, shape index: {}]
  %s3 = sld [smem:[#allocation0]]
  $region30: #{tpu_custom_call.1} parent=0
    _
  %s5 = ssub.s32 1, %s3
  %s6 = scalar_select 0, %s5, %s3
  $region1: #{tpu_custom_call.1} parent=0
    #allocation4 [shape = 'u8[1024]{0}', space=vmem, size = 0x400, scoped, tag = 'input window, operand 0, single buffered']
    #allocation5 [shape = 's32[1]{0}', space=sflag, size = 0x4, scoped, tag = 'scoped memory for tpu_custom_call.1']
    #allocation6 [shape = 's32[1]{0}', space=sflag, size = 0x4, scoped, tag = 'scoped memory for tpu_custom_call.1']
    #allocation7 [shape = 'u8[512]{0}', space=vmem, size = 0x400, scoped, tag = 'output window, operand 0, single buffered']
    %7 = vsyncpa [#allocation5], 0
    %8 = vsyncpa [#allocation6], 0
    // Predicated region
    $region2: #{tpu_custom_call.1} parent=1 // pred_check
      _
    $region3: #{tpu_custom_call.1} parent=1 // pred_check_branch
      %10 = sbr.rel (0) target = $region5
    $region4: #{tpu_custom_call.1} parent=1 // pred_region
      %s12 = ssub.s32 32, 32
      %13 = vsyncadd [#allocation5], %s12
      %s15 = sshll.u32 [#allocation4], 4
      %s16 = int_to_ptr.vmem [resolvable:$true] %s15
      %18 = dma.hbm_to_vmem [thread:$0]  %s0, 32, %s16, [#allocation5]
    $region5: #{tpu_custom_call.1} parent=1 // pred_fallthru
      _
    // Predicated region
    $region6: #{tpu_custom_call.1} parent=1 // pred_check
      _
    $region7: #{tpu_custom_call.1} parent=1 // pred_check_branch
      %20 = sbr.rel (0) target = $region9
    $region8: #{tpu_custom_call.1} parent=1 // pred_region
      _
    $region9: #{tpu_custom_call.1} parent=1 // pred_fallthru
      _
    // Predicated region
    $region10: #{tpu_custom_call.1} parent=1 // pred_check
      _
    $region11: #{tpu_custom_call.1} parent=1 // pred_check_branch
      %22 = sbr.rel (0) target = $region13
    $region12: #{tpu_custom_call.1} parent=1 // pred_region
      %23 = dma.done [#allocation5], 32
    $region13: #{tpu_custom_call.1} parent=1 // pred_fallthru
      _
    %p24 = scmp.eq.s32.totalorder 0, 0
    // Predicated region
    $region14: #{tpu_custom_call.1} parent=1 // pred_check
      %p25 = pneg %p24
    $region15: #{tpu_custom_call.1} parent=1 // pred_check_branch
      %27 = sbr.rel (%p25) target = $region17
    $region16: #{tpu_custom_call.1} parent=1 // pred_region
      %vm28 = vcmask 0
      %29 = vst.msk [vmem:[#allocation2] sm:$0x1] %vm28, 0.0
      %30 = vst.msk [vmem:[#allocation3] sm:$0x1] %vm28, 0.0
    $region17: #{tpu_custom_call.1} parent=1 // pred_fallthru
      _
    %v31 = vld [vmem:[#allocation4] sm:$0x3]
    %v32 = vld [vmem:[%s1] sm:$0x3]
    %v33 = vsub.f32 %v31, %v32
    %v34 = vmul.f32 %v33, %v33
    %v36 = vrot.slane %v34, 1
    %v38 = vadd.f32 %v34, %v36
    %v39 = vmul.f32 %v31, %v32
    %v41 = vrot.slane %v39, 1
    %v43 = vadd.f32 %v39, %v41
    %v44 = vmul.f32 %v31, %v31
    %v46 = vrot.slane %v44, 1
    %v48 = vadd.f32 %v44, %v46
    %v49 = vrsqrt.pop %v48
    %v50 = vmul.f32 %v48, %v49
    %vm51 = vcmp.eq.f32.partialorder %v48, inf
    %v52 = vsel %vm51, %v48, %v50
    %vm53 = vcmp.eq.f32.partialorder %v48, 0.0
    %v54 = vand.u32 %v48, 2147483648
    %v55 = vsel %vm53, %v54, %v52
    %v56 = vmul.f32 %v32, %v32
    %v58 = vrot.slane %v56, 1
    %v60 = vadd.f32 %v56, %v58
    %v61 = vrsqrt.pop %v60
    %v62 = vmul.f32 %v60, %v61
    %vm63 = vcmp.eq.f32.partialorder %v60, inf
    %v64 = vsel %vm63, %v60, %v62
    %vm65 = vcmp.eq.f32.partialorder %v60, 0.0
    %v66 = vand.u32 %v60, 2147483648
    %v67 = vsel %vm65, %v66, %v64
    %v68 = vmul.f32 %v55, %v67
    %v69 = vadd.f32 %v68, 1e-06
    %v70 = vrcp.pop %v69
    %v71 = vmul.f32 %v43, %v70
    %v72 = vld [vmem:[#allocation2] sm:$0x1]
    %vm73 = vcmask 1040384
    %v74 = vsel %vm73, %v38, 0.0
    %75 = vadd.xlane.f32.xlu0 %v74
    %v76 = vpop.xlane.xlu0 %75
    %v77 = vrot.slane %v76, 4
    %v78 = vadd.f32 %v76, %v77
    %v79 = vrot.slane %v78, 2
    %v80 = vadd.f32 %v78, %v79
    %v81 = vrot.slane %v80, 1
    %v82 = vadd.f32 %v80, %v81
    %s83 = vtos %v82
    %v84 = vstv %s83
    %v85 = vadd.f32 %v72, %v84
    %vm86 = vcmask 0
    %87 = vst.msk [vmem:[#allocation2] sm:$0x1] %vm86, %v85
    %v88 = vld [vmem:[#allocation3] sm:$0x1]
    %v89 = vsel %vm73, %v71, 0.0
    %90 = vadd.xlane.f32.xlu0 %v89
    %v91 = vpop.xlane.xlu0 %90
    %v92 = vrot.slane %v91, 4
    %v93 = vadd.f32 %v91, %v92
    %v94 = vrot.slane %v93, 2
    %v95 = vadd.f32 %v93, %v94
    %v96 = vrot.slane %v95, 1
    %v97 = vadd.f32 %v95, %v96
    %s98 = vtos %v97
    %v99 = vstv %s98
    %v100 = vadd.f32 %v88, %v99
    %101 = vst.msk [vmem:[#allocation3] sm:$0x1] %vm86, %v100
    // Predicated region
    $region18: #{tpu_custom_call.1} parent=1 // pred_check
      %p102 = pneg %p24
    $region19: #{tpu_custom_call.1} parent=1 // pred_check_branch
      %104 = sbr.rel (%p102) target = $region21
    $region20: #{tpu_custom_call.1} parent=1 // pred_region
      %v105 = vld [vmem:[#allocation2] sm:$0x1]
      %v106 = vmul.f32 %v105, 0.0625
      %v107 = vld [vmem:[#allocation3] sm:$0x1]
      %v108 = vmul.f32 %v107, 0.125
      %v109 = vsub.f32 1.0, %v108
      %v110 = vadd.f32 %v106, %v109
      %111 = vst.msk [vmem:[#allocation7] sm:$0x1] %vm86, %v110
    $region21: #{tpu_custom_call.1} parent=1 // pred_fallthru
      _
    // Predicated region
    $region22: #{tpu_custom_call.1} parent=1 // pred_check
      _
    $region23: #{tpu_custom_call.1} parent=1 // pred_check_branch
      %113 = sbr.rel (0) target = $region25
    $region24: #{tpu_custom_call.1} parent=1 // pred_region
      %s115 = ssub.s32 16, 16
      %116 = vsyncadd [#allocation6], %s115
      %s118 = sshll.u32 [#allocation7], 4
      %s119 = int_to_ptr.vmem [resolvable:$true] %s118
      %121 = dma.vmem_to_hbm [thread:$0]  %s119, 16, %s2, [#allocation6]
    $region25: #{tpu_custom_call.1} parent=1 // pred_fallthru
      _
    // Predicated region
    $region26: #{tpu_custom_call.1} parent=1 // pred_check
      _
    $region27: #{tpu_custom_call.1} parent=1 // pred_check_branch
      %123 = sbr.rel (0) target = $region29
    $region28: #{tpu_custom_call.1} parent=1 // pred_region
      %124 = dma.done [#allocation6], 16
    $region29: #{tpu_custom_call.1} parent=1 // pred_fallthru
      _
    %125 = vsyncpa [#allocation5], 1
    %126 = vsyncpa [#allocation6], 1

</llo_original>
